<compile_context>
chip_gen: v7x
topology: tpu7x:2x2x1
jax: 0.10.0
libtpu: 0.0.40
codegen_flags: <defaults>
</compile_context>

<pallas_src>
import jax
import jax.numpy as jnp
from jax import lax
from jax.experimental import pallas as pl
from jax.experimental.pallas import tpu as pltpu

EPS = 1e-5   # PyTorch BatchNorm1d default
PAD = 128    # lane-dense feature padding (all feature dims <= 128 here)


def _make_kernel(B):
    inv_b = 1.0 / B  # Python float -> jaxpr literal (NOT a captured jax.Array)

    def kernel(x_ref, w_ref, p_ref, o_ref):
        # x_ref: (B, PAD) f32; w_ref: (4, PAD, PAD); p_ref: (8, PAD); o_ref: (B, PAD)
        x = x_ref[...]

        def lin_bn_relu(h, w, g, be):
            # Linear (pre-BN bias omitted: exactly cancelled by mean subtraction)
            z = jnp.dot(h, w, preferred_element_type=jnp.float32)
            # Two independent axis-0 reductions -> mu and E[z^2]
            mu = jnp.sum(z, axis=0, keepdims=True) * inv_b
            ez2 = jnp.sum(z * z, axis=0, keepdims=True) * inv_b
            var = jnp.maximum(ez2 - mu * mu, 0.0)  # clamp f32 cancellation error
            # Fold BN affine into one (1, PAD) scale/shift pair
            scale = g * lax.rsqrt(var + EPS)
            shift = be - mu * scale
            return jnp.maximum(z * scale + shift, 0.0)

        h1 = lin_bn_relu(x,  w_ref[0], p_ref[0:1, :], p_ref[1:2, :])
        h2 = lin_bn_relu(h1, w_ref[1], p_ref[2:3, :], p_ref[3:4, :])
        h3 = lin_bn_relu(h2, w_ref[2], p_ref[4:5, :], p_ref[5:6, :])
        # Final Linear (keeps its bias; no BN / ReLU). Padded cols stay exactly 0.
        y = jnp.dot(h3, w_ref[3], preferred_element_type=jnp.float32) + p_ref[6:7, :]
        o_ref[...] = y

    return kernel


def pack_params(params, dims):
    """Pack all layer tensors into 2 lane-dense slabs. Done once, wrapper-side.
    b1..b3 are intentionally dropped (mathematically dead under training-mode BN).
    Padded gamma/beta/bias entries are ZERO -> padded columns stay 0 end-to-end."""
    IN, H1, H2, H3, OUT = dims
    assert max(dims) <= PAD, "feature dims must fit the 128-lane padding"

    def pad_w(w):
        k, n = w.shape
        return jnp.zeros((PAD, PAD), jnp.float32).at[:k, :n].set(w)

    w_slab = jnp.stack([pad_w(params["w1"]), pad_w(params["w2"]),
                        pad_w(params["w3"]), pad_w(params["w4"])])

    def pad_row(v):
        v = v.reshape(-1)
        return jnp.zeros((PAD,), jnp.float32).at[:v.shape[0]].set(v)

    p_slab = jnp.stack([
        pad_row(params["g1"]), pad_row(params["be1"]),
        pad_row(params["g2"]), pad_row(params["be2"]),
        pad_row(params["g3"]), pad_row(params["be3"]),
        pad_row(params["b4"]),
        jnp.zeros((PAD,), jnp.float32),          # pad to 8 rows (sublane-aligned)
    ])
    return w_slab, p_slab


def mynet2_forward(x, w_slab, p_slab, dims):
    """x: [NB, B, IN] f32 — NB independent mini-batches, each one full forward pass
    of Mynet2 (BatchNorm uses that mini-batch's statistics, training mode).
    Returns [NB, B, OUT]."""
    IN, H1, H2, H3, OUT = dims
    NB, B, _ = x.shape

    # Lane-pad the input (padded x columns multiply zero weight rows -> inert).
    x_pad = jnp.zeros((NB, B, PAD), jnp.float32).at[:, :, :IN].set(x)

    kernel = _make_kernel(B)
    out = pl.pallas_call(
        kernel,
        out_shape=jax.ShapeDtypeStruct((NB, B, PAD), jnp.float32),
        grid=(NB,),
        in_specs=[
            # one mini-batch per grid step, auto-pipelined
            pl.BlockSpec((None, B, PAD), lambda i: (i, 0, 0)),
            # weights / BN params: constant block index -> VMEM-resident across steps
            pl.BlockSpec((4, PAD, PAD), lambda i: (0, 0, 0)),
            pl.BlockSpec((8, PAD), lambda i: (0, 0)),
        ],
        out_specs=pl.BlockSpec((None, B, PAD), lambda i: (i, 0, 0)),
        compiler_params=pltpu.CompilerParams(
            dimension_semantics=("parallel",)),   # shard mini-batches across v7x TCs
    )(x_pad, w_slab, p_slab)

    # Lane-dense store inside the kernel; slice back to the true output width here.
    return out[:, :, :OUT]


def init_params(key, input_dim, h1, h2, h3, output_dim):
    """Deterministic init. Linear weights pre-transposed to [in, out]; biases for ALL
    layers (the reference uses them; the kernel legitimately drops b1..b3).
    BN gamma=1, beta=0 (PyTorch defaults, freshly-constructed module)."""
    dims = [(input_dim, h1), (h1, h2), (h2, h3), (h3, output_dim)]
    params = {}
    keys = jax.random.split(key, 2 * len(dims))
    for i, (fan_in, fan_out) in enumerate(dims):
        bound = 1.0 / float(jnp.sqrt(fan_in))
        params[f"w{i + 1}"] = jax.random.uniform(
            keys[2 * i], (fan_in, fan_out), minval=-bound, maxval=bound,
            dtype=jnp.float32)
        params[f"b{i + 1}"] = jax.random.uniform(
            keys[2 * i + 1], (1, fan_out), minval=-bound, maxval=bound,
            dtype=jnp.float32)
    for i, h in enumerate((h1, h2, h3)):
        params[f"g{i + 1}"] = jnp.ones((1, h), jnp.float32)     # BN gamma
        params[f"be{i + 1}"] = jnp.zeros((1, h), jnp.float32)   # BN beta
    return params


def _reference(x, p):
    """Pure-JAX reference of the PyTorch forward (training-mode BN), WITH the pre-BN
    biases, applied independently per mini-batch — verifies the exact-cancellation
    claim numerically."""
    def one(xb):
        h = xb
        for i in range(1, 4):
            z = h @ p[f"w{i}"] + p[f"b{i}"]
            mu = jnp.mean(z, axis=0, keepdims=True)
            var = jnp.mean((z - mu) ** 2, axis=0, keepdims=True)
            zn = (z - mu) / jnp.sqrt(var + EPS)
            h = jnp.maximum(zn * p[f"g{i}"] + p[f"be{i}"], 0.0)
        return h @ p["w4"] + p["b4"]
    return jax.vmap(one)(x)


if __name__ == "__main__":
    key = jax.random.PRNGKey(0)
    k_x, k_p = jax.random.split(key)

    NB, B = 4, 8                            # 4 independent mini-batches of 8 rows
    IN, H1, H2, H3, OUT = 32, 64, 48, 32, 16
    dims = (IN, H1, H2, H3, OUT)

    x = jax.random.normal(k_x, (NB, B, IN), dtype=jnp.float32)
    params = init_params(k_p, IN, H1, H2, H3, OUT)

    # Pack once (wrapper-side); the kernel call then has only 3 input operands.
    w_slab, p_slab = pack_params(params, dims)

    y = mynet2_forward(x, w_slab, p_slab, dims)
    y = jax.block_until_ready(y)

    y_ref = _reference(x, params)
    assert y.shape == (NB, B, OUT)
    assert jnp.allclose(y, y_ref, atol=2e-4, rtol=2e-4), "mismatch vs reference"

    print("KERNEL_OK")
</pallas_src>

<mosaic_0001>
module attributes {stable_mosaic.version = 11 : i64} {
  func.func @kernel(%arg0: i32, %arg1: memref<1x8x128xf32, #tpu.memory_space<vmem>>, %arg2: memref<4x128x128xf32, #tpu.memory_space<vmem>>, %arg3: memref<8x128xf32, #tpu.memory_space<vmem>>, %arg4: memref<1x8x128xf32, #tpu.memory_space<vmem>>) attributes {dimension_semantics = [#tpu.dimension_semantics<parallel>], iteration_bounds = array<i64: 4>, scalar_prefetch = 0 : i64, scratch_operands = 0 : i64, tpu.core_type = #tpu.core_type<tc>, window_params = [{transform_indices = @transform_0, window_bounds = array<i64: 1, 8, 128>}, {pipeline_mode = #tpu.pipeline_mode<synchronous>, transform_indices = @transform_1, window_bounds = array<i64: 4, 128, 128>}, {pipeline_mode = #tpu.pipeline_mode<synchronous>, transform_indices = @transform_2, window_bounds = array<i64: 8, 128>}, {transform_indices = @transform_3, window_bounds = array<i64: 1, 8, 128>}]} {
    %c0 = arith.constant 0 : index
    %c0_0 = arith.constant 0 : index
    %c0_1 = arith.constant 0 : index
    %0 = vector.load %arg1[%c0, %c0_0, %c0_1] : memref<1x8x128xf32, #tpu.memory_space<vmem>>, vector<1x8x128xf32>
    %1 = vector.shape_cast %0 : vector<1x8x128xf32> to vector<8x128xf32>
    %c0_2 = arith.constant 0 : index
    %c0_3 = arith.constant 0 : index
    %c0_4 = arith.constant 0 : index
    %2 = vector.load %arg2[%c0_2, %c0_3, %c0_4] : memref<4x128x128xf32, #tpu.memory_space<vmem>>, vector<1x128x128xf32>
    %3 = vector.shape_cast %2 : vector<1x128x128xf32> to vector<128x128xf32>
    %c0_5 = arith.constant 0 : index
    %c0_6 = arith.constant 0 : index
    %4 = vector.load %arg3[%c0_5, %c0_6] : memref<8x128xf32, #tpu.memory_space<vmem>>, vector<1x128xf32>
    %c1 = arith.constant 1 : index
    %c0_7 = arith.constant 0 : index
    %5 = vector.load %arg3[%c1, %c0_7] : memref<8x128xf32, #tpu.memory_space<vmem>>, vector<1x128xf32>
    %cst = arith.constant dense<0.000000e+00> : vector<8x128xf32>
    %6 = tpu.matmul %1, %3, %cst {dimension_numbers = #tpu.dot_dimension_numbers<[1], [0], [0], [1], [0, 0, 1, 1], [], []>} : vector<8x128xf32>, vector<128x128xf32>, vector<8x128xf32> -> vector<8x128xf32>
    %cst_8 = arith.constant dense<0.000000e+00> : vector<128xf32>
    %7 = vector.multi_reduction <add>, %6, %cst_8 [0] : vector<8x128xf32> to vector<128xf32>
    %8 = vector.shape_cast %7 : vector<128xf32> to vector<1x128xf32>
    %cst_9 = arith.constant 1.250000e-01 : f32
    %9 = vector.broadcast %cst_9 : f32 to vector<1x128xf32>
    %10 = arith.mulf %8, %9 : vector<1x128xf32>
    %11 = arith.mulf %6, %6 : vector<8x128xf32>
    %cst_10 = arith.constant dense<0.000000e+00> : vector<128xf32>
    %12 = vector.multi_reduction <add>, %11, %cst_10 [0] : vector<8x128xf32> to vector<128xf32>
    %13 = vector.shape_cast %12 : vector<128xf32> to vector<1x128xf32>
    %cst_11 = arith.constant 1.250000e-01 : f32
    %14 = vector.broadcast %cst_11 : f32 to vector<1x128xf32>
    %15 = arith.mulf %13, %14 : vector<1x128xf32>
    %16 = arith.mulf %10, %10 : vector<1x128xf32>
    %17 = arith.subf %15, %16 : vector<1x128xf32>
    %cst_12 = arith.constant 0.000000e+00 : f32
    %18 = vector.broadcast %cst_12 : f32 to vector<1x128xf32>
    %19 = arith.maximumf %17, %18 : vector<1x128xf32>
    %cst_13 = arith.constant 9.99999974E-6 : f32
    %20 = vector.broadcast %cst_13 : f32 to vector<1x128xf32>
    %21 = arith.addf %19, %20 : vector<1x128xf32>
    %22 = math.rsqrt %21 : vector<1x128xf32>
    %23 = arith.mulf %4, %22 : vector<1x128xf32>
    %24 = arith.mulf %10, %23 : vector<1x128xf32>
    %25 = arith.subf %5, %24 : vector<1x128xf32>
    %26 = vector.broadcast %23 : vector<1x128xf32> to vector<8x128xf32>
    %27 = arith.mulf %6, %26 : vector<8x128xf32>
    %28 = vector.broadcast %25 : vector<1x128xf32> to vector<8x128xf32>
    %29 = arith.addf %27, %28 : vector<8x128xf32>
    %cst_14 = arith.constant 0.000000e+00 : f32
    %30 = vector.broadcast %cst_14 : f32 to vector<8x128xf32>
    %31 = arith.maximumf %29, %30 : vector<8x128xf32>
    %c1_15 = arith.constant 1 : index
    %c0_16 = arith.constant 0 : index
    %c0_17 = arith.constant 0 : index
    %32 = vector.load %arg2[%c1_15, %c0_16, %c0_17] : memref<4x128x128xf32, #tpu.memory_space<vmem>>, vector<1x128x128xf32>
    %33 = vector.shape_cast %32 : vector<1x128x128xf32> to vector<128x128xf32>
    %c2 = arith.constant 2 : index
    %c0_18 = arith.constant 0 : index
    %34 = vector.load %arg3[%c2, %c0_18] : memref<8x128xf32, #tpu.memory_space<vmem>>, vector<1x128xf32>
    %c3 = arith.constant 3 : index
    %c0_19 = arith.constant 0 : index
    %35 = vector.load %arg3[%c3, %c0_19] : memref<8x128xf32, #tpu.memory_space<vmem>>, vector<1x128xf32>
    %cst_20 = arith.constant dense<0.000000e+00> : vector<8x128xf32>
    %36 = tpu.matmul %31, %33, %cst_20 {dimension_numbers = #tpu.dot_dimension_numbers<[1], [0], [0], [1], [0, 0, 1, 1], [], []>} : vector<8x128xf32>, vector<128x128xf32>, vector<8x128xf32> -> vector<8x128xf32>
    %cst_21 = arith.constant dense<0.000000e+00> : vector<128xf32>
    %37 = vector.multi_reduction <add>, %36, %cst_21 [0] : vector<8x128xf32> to vector<128xf32>
    %38 = vector.shape_cast %37 : vector<128xf32> to vector<1x128xf32>
    %cst_22 = arith.constant 1.250000e-01 : f32
    %39 = vector.broadcast %cst_22 : f32 to vector<1x128xf32>
    %40 = arith.mulf %38, %39 : vector<1x128xf32>
    %41 = arith.mulf %36, %36 : vector<8x128xf32>
    %cst_23 = arith.constant dense<0.000000e+00> : vector<128xf32>
    %42 = vector.multi_reduction <add>, %41, %cst_23 [0] : vector<8x128xf32> to vector<128xf32>
    %43 = vector.shape_cast %42 : vector<128xf32> to vector<1x128xf32>
    %cst_24 = arith.constant 1.250000e-01 : f32
    %44 = vector.broadcast %cst_24 : f32 to vector<1x128xf32>
    %45 = arith.mulf %43, %44 : vector<1x128xf32>
    %46 = arith.mulf %40, %40 : vector<1x128xf32>
    %47 = arith.subf %45, %46 : vector<1x128xf32>
    %cst_25 = arith.constant 0.000000e+00 : f32
    %48 = vector.broadcast %cst_25 : f32 to vector<1x128xf32>
    %49 = arith.maximumf %47, %48 : vector<1x128xf32>
    %cst_26 = arith.constant 9.99999974E-6 : f32
    %50 = vector.broadcast %cst_26 : f32 to vector<1x128xf32>
    %51 = arith.addf %49, %50 : vector<1x128xf32>
    %52 = math.rsqrt %51 : vector<1x128xf32>
    %53 = arith.mulf %34, %52 : vector<1x128xf32>
    %54 = arith.mulf %40, %53 : vector<1x128xf32>
    %55 = arith.subf %35, %54 : vector<1x128xf32>
    %56 = vector.broadcast %53 : vector<1x128xf32> to vector<8x128xf32>
    %57 = arith.mulf %36, %56 : vector<8x128xf32>
    %58 = vector.broadcast %55 : vector<1x128xf32> to vector<8x128xf32>
    %59 = arith.addf %57, %58 : vector<8x128xf32>
    %cst_27 = arith.constant 0.000000e+00 : f32
    %60 = vector.broadcast %cst_27 : f32 to vector<8x128xf32>
    %61 = arith.maximumf %59, %60 : vector<8x128xf32>
    %c2_28 = arith.constant 2 : index
    %c0_29 = arith.constant 0 : index
    %c0_30 = arith.constant 0 : index
    %62 = vector.load %arg2[%c2_28, %c0_29, %c0_30] : memref<4x128x128xf32, #tpu.memory_space<vmem>>, vector<1x128x128xf32>
    %63 = vector.shape_cast %62 : vector<1x128x128xf32> to vector<128x128xf32>
    %c4 = arith.constant 4 : index
    %c0_31 = arith.constant 0 : index
    %64 = vector.load %arg3[%c4, %c0_31] : memref<8x128xf32, #tpu.memory_space<vmem>>, vector<1x128xf32>
    %c5 = arith.constant 5 : index
    %c0_32 = arith.constant 0 : index
    %65 = vector.load %arg3[%c5, %c0_32] : memref<8x128xf32, #tpu.memory_space<vmem>>, vector<1x128xf32>
    %cst_33 = arith.constant dense<0.000000e+00> : vector<8x128xf32>
    %66 = tpu.matmul %61, %63, %cst_33 {dimension_numbers = #tpu.dot_dimension_numbers<[1], [0], [0], [1], [0, 0, 1, 1], [], []>} : vector<8x128xf32>, vector<128x128xf32>, vector<8x128xf32> -> vector<8x128xf32>
    %cst_34 = arith.constant dense<0.000000e+00> : vector<128xf32>
    %67 = vector.multi_reduction <add>, %66, %cst_34 [0] : vector<8x128xf32> to vector<128xf32>
    %68 = vector.shape_cast %67 : vector<128xf32> to vector<1x128xf32>
    %cst_35 = arith.constant 1.250000e-01 : f32
    %69 = vector.broadcast %cst_35 : f32 to vector<1x128xf32>
    %70 = arith.mulf %68, %69 : vector<1x128xf32>
    %71 = arith.mulf %66, %66 : vector<8x128xf32>
    %cst_36 = arith.constant dense<0.000000e+00> : vector<128xf32>
    %72 = vector.multi_reduction <add>, %71, %cst_36 [0] : vector<8x128xf32> to vector<128xf32>
    %73 = vector.shape_cast %72 : vector<128xf32> to vector<1x128xf32>
    %cst_37 = arith.constant 1.250000e-01 : f32
    %74 = vector.broadcast %cst_37 : f32 to vector<1x128xf32>
    %75 = arith.mulf %73, %74 : vector<1x128xf32>
    %76 = arith.mulf %70, %70 : vector<1x128xf32>
    %77 = arith.subf %75, %76 : vector<1x128xf32>
    %cst_38 = arith.constant 0.000000e+00 : f32
    %78 = vector.broadcast %cst_38 : f32 to vector<1x128xf32>
    %79 = arith.maximumf %77, %78 : vector<1x128xf32>
    %cst_39 = arith.constant 9.99999974E-6 : f32
    %80 = vector.broadcast %cst_39 : f32 to vector<1x128xf32>
    %81 = arith.addf %79, %80 : vector<1x128xf32>
    %82 = math.rsqrt %81 : vector<1x128xf32>
    %83 = arith.mulf %64, %82 : vector<1x128xf32>
    %84 = arith.mulf %70, %83 : vector<1x128xf32>
    %85 = arith.subf %65, %84 : vector<1x128xf32>
    %86 = vector.broadcast %83 : vector<1x128xf32> to vector<8x128xf32>
    %87 = arith.mulf %66, %86 : vector<8x128xf32>
    %88 = vector.broadcast %85 : vector<1x128xf32> to vector<8x128xf32>
    %89 = arith.addf %87, %88 : vector<8x128xf32>
    %cst_40 = arith.constant 0.000000e+00 : f32
    %90 = vector.broadcast %cst_40 : f32 to vector<8x128xf32>
    %91 = arith.maximumf %89, %90 : vector<8x128xf32>
    %c3_41 = arith.constant 3 : index
    %c0_42 = arith.constant 0 : index
    %c0_43 = arith.constant 0 : index
    %92 = vector.load %arg2[%c3_41, %c0_42, %c0_43] : memref<4x128x128xf32, #tpu.memory_space<vmem>>, vector<1x128x128xf32>
    %93 = vector.shape_cast %92 : vector<1x128x128xf32> to vector<128x128xf32>
    %cst_44 = arith.constant dense<0.000000e+00> : vector<8x128xf32>
    %94 = tpu.matmul %91, %93, %cst_44 {dimension_numbers = #tpu.dot_dimension_numbers<[1], [0], [0], [1], [0, 0, 1, 1], [], []>} : vector<8x128xf32>, vector<128x128xf32>, vector<8x128xf32> -> vector<8x128xf32>
    %c6 = arith.constant 6 : index
    %c0_45 = arith.constant 0 : index
    %95 = vector.load %arg3[%c6, %c0_45] : memref<8x128xf32, #tpu.memory_space<vmem>>, vector<1x128xf32>
    %96 = vector.broadcast %95 : vector<1x128xf32> to vector<8x128xf32>
    %97 = arith.addf %94, %96 : vector<8x128xf32>
    %c0_46 = arith.constant 0 : index
    %c0_47 = arith.constant 0 : index
    %c0_48 = arith.constant 0 : index
    %98 = vector.load %arg4[%c0_46, %c0_47, %c0_48] : memref<1x8x128xf32, #tpu.memory_space<vmem>>, vector<1x8x128xf32>
    %99 = vector.shape_cast %98 : vector<1x8x128xf32> to vector<8x128xf32>
    %100 = vector.shape_cast %97 : vector<8x128xf32> to vector<1x8x128xf32>
    tpu.vector_store %arg4[%c0_46, %c0_47, %c0_48], %100 {strides = array<i32>} : memref<1x8x128xf32, #tpu.memory_space<vmem>>, vector<1x8x128xf32>,
    return
  }
  func.func @transform_0(%arg0: i32) -> (i32, i32, i32) {
    %c0_i32 = arith.constant 0 : i32
    %c0_i32_0 = arith.constant 0 : i32
    %c0_i32_1 = arith.constant 0 : i32
    return %arg0, %c0_i32, %c0_i32_0 : i32, i32, i32
  }
  func.func @transform_1(%arg0: i32) -> (i32, i32, i32) {
    %c0_i32 = arith.constant 0 : i32
    %c0_i32_0 = arith.constant 0 : i32
    %c0_i32_1 = arith.constant 0 : i32
    %c0_i32_2 = arith.constant 0 : i32
    return %c0_i32, %c0_i32_0, %c0_i32_1 : i32, i32, i32
  }
  func.func @transform_2(%arg0: i32) -> (i32, i32) {
    %c0_i32 = arith.constant 0 : i32
    %c0_i32_0 = arith.constant 0 : i32
    %c0_i32_1 = arith.constant 0 : i32
    return %c0_i32, %c0_i32_0 : i32, i32
  }
  func.func @transform_3(%arg0: i32) -> (i32, i32, i32) {
    %c0_i32 = arith.constant 0 : i32
    %c0_i32_0 = arith.constant 0 : i32
    %c0_i32_1 = arith.constant 0 : i32
    return %arg0, %c0_i32, %c0_i32_0 : i32, i32, i32
  }
}

</mosaic_0001>

<llo_original>
// kernel: tpu_custom_call.1
$region0: #{tpu_custom_call.1}
  #allocation0 [shape = 'u32[]', space=smem, size = 0x4, offset = 0x4, fixed_abs, tag = 'smem constant byte address 0x4 - core index']
  #allocation1 [shape = 'u32[144,128]{1,0:T(1,128)}', space=vmem, size = 0x12000, scoped, tag = 'internal scratch']
  %s0 = inlined_call_operand.hbm [shape: f32[4,8,128], index: 0, kind: input, shape index: {}]
  %s1 = inlined_call_operand.hbm [shape: f32[4,128,128], index: 1, kind: input, shape index: {}]
  %s2 = inlined_call_operand.hbm [shape: f32[8,128], index: 2, kind: input, shape index: {}]
  %s3 = inlined_call_operand.hbm [shape: f32[4,8,128], index: 3, kind: output, shape index: {}]
  %s4 = sld [smem:[#allocation0]]
  $region57: #{tpu_custom_call.1} parent=0
    _
  %s6 = ssub.s32 1, %s4
  %s7 = scalar_select 0, %s6, %s4
  $region1: #{tpu_custom_call.1} parent=0
    #allocation2 [shape = 'u8[8192]{0}', space=vmem, size = 0x2000, scoped, tag = 'input window, operand 0']
    #allocation3 [shape = 's32[2]{0}', space=sflag, size = 0x8, scoped, tag = 'scoped memory for tpu_custom_call.1']
    #allocation4 [shape = 's32[2]{0}', space=sflag, size = 0x8, scoped, tag = 'scoped memory for tpu_custom_call.1']
    #allocation5 [shape = 'u8[262144]{0}', space=vmem, size = 0x40000, scoped, tag = 'input window, operand 1, single buffered']
    #allocation6 [shape = 's32[1]{0}', space=sflag, size = 0x4, scoped, tag = 'scoped memory for tpu_custom_call.1']
    #allocation7 [shape = 'u8[4096]{0}', space=vmem, size = 0x1000, scoped, tag = 'input window, operand 2, single buffered']
    #allocation8 [shape = 'u8[8192]{0}', space=vmem, size = 0x2000, scoped, tag = 'output window, operand 0']
    %8 = vsyncpa [#allocation3], 0
    %s9 = scalar_lea.sflag [#allocation3], 1
    %10 = vsyncpa %s9, 0
    %11 = vsyncpa [#allocation6], 0
    %12 = vsyncpa [#allocation4], 0
    %s13 = scalar_lea.sflag [#allocation4], 1
    %14 = vsyncpa %s13, 0
    loop: start=0, step=1, limit=6
    $region2: #{tpu_custom_call.1} parent=1 // loop_pre_header
      _
    $region3: #{tpu_custom_call.1} parent=1 // loop_header
      %s16 = sphi 0, %s20
      %p17 = scmp.ge.s32.totalorder %s16, 6
      %s26 = sphi 0, %s28
      %s29 = sphi 0, %s26
      %s30 = sphi 0, %s29
      %s46 = sphi 0, %s30
      %s50 = sphi 0, %s50
      %s52 = sphi 0, %s50
      %s53 = sphi 0, %s52
      %s67 = sphi 0, %s53
      %s71 = sphi 0, %s71
      %s73 = sphi 0, %s71
      %s74 = sphi 0, %s73
      %s88 = sphi 0, %s74
      %s94 = sphi 0, %s96
      %s97 = sphi 0, %s94
      %s98 = sphi 0, %s97
      %s114 = sphi 0, %s98
    $region4: #{tpu_custom_call.1} parent=1 // loop_header_branch
      %19 = sbr.rel (%p17) target = $region8
    $region5: #{tpu_custom_call.1} parent=1 // loop_body
      %s21 = ssub.s32 %s16, 1
      %s22 = ssub.s32 %s16, 2
      %s23 = sadd.s32 %s16, 1
      %s24 = ssub.s32 %s16, %s23
      %p25 = scmp.eq.s32.totalorder %s24, 0
      %s27 = sadd.s32 %s26, 1
      %s28 = scalar_select %p25, %s26, %s27
      %p31 = pneg %p25
      %p32 = scmp.eq.s32.totalorder %s16, 3
      %p33 = por %p31, %p32
      %p34 = scmp.ne.s32.totalorder %s26, %s29
      %p35 = scmp.eq.s32.totalorder %s16, 0
      %p36 = por %p34, %p35
      %p37 = scmp.ne.s32.totalorder %s26, %s29
      %p38 = scmp.eq.s32.totalorder %s21, 3
      %p39 = por %p37, %p38
      %p40 = scmp.ne.s32.totalorder %s29, %s30
      %p41 = scmp.eq.s32.totalorder %s21, 0
      %p42 = por %p40, %p41
      %p43 = scmp.ne.s32.totalorder %s29, %s30
      %p44 = scmp.eq.s32.totalorder %s22, 3
      %p45 = por %p43, %p44
      %p47 = scmp.ne.s32.totalorder %s30, %s46
      %p48 = scmp.eq.s32.totalorder %s22, 0
      %p49 = por %p47, %p48
      %s51 = sadd.s32 %s50, 1
      %p54 = scmp.eq.s32.totalorder %s16, 3
      %p55 = scmp.ne.s32.totalorder %s50, %s52
      %p56 = scmp.eq.s32.totalorder %s16, 0
      %p57 = por %p55, %p56
      %p58 = scmp.ne.s32.totalorder %s50, %s52
      %p59 = scmp.eq.s32.totalorder %s21, 3
      %p60 = por %p58, %p59
      %p61 = scmp.ne.s32.totalorder %s52, %s53
      %p62 = scmp.eq.s32.totalorder %s21, 0
      %p63 = por %p61, %p62
      %p64 = scmp.ne.s32.totalorder %s52, %s53
      %p65 = scmp.eq.s32.totalorder %s22, 3
      %p66 = por %p64, %p65
      %p68 = scmp.ne.s32.totalorder %s53, %s67
      %p69 = scmp.eq.s32.totalorder %s22, 0
      %p70 = por %p68, %p69
      %s72 = sadd.s32 %s71, 1
      %p75 = scmp.eq.s32.totalorder %s16, 3
      %p76 = scmp.ne.s32.totalorder %s71, %s73
      %p77 = scmp.eq.s32.totalorder %s16, 0
      %p78 = por %p76, %p77
      %p79 = scmp.ne.s32.totalorder %s71, %s73
      %p80 = scmp.eq.s32.totalorder %s21, 3
      %p81 = por %p79, %p80
      %p82 = scmp.ne.s32.totalorder %s73, %s74
      %p83 = scmp.eq.s32.totalorder %s21, 0
      %p84 = por %p82, %p83
      %p85 = scmp.ne.s32.totalorder %s73, %s74
      %p86 = scmp.eq.s32.totalorder %s22, 3
      %p87 = por %p85, %p86
      %p89 = scmp.ne.s32.totalorder %s74, %s88
      %p90 = scmp.eq.s32.totalorder %s22, 0
      %p91 = por %p89, %p90
      %s92 = ssub.s32 %s16, %s23
      %p93 = scmp.eq.s32.totalorder %s92, 0
      %s95 = sadd.s32 %s94, 1
      %s96 = scalar_select %p93, %s94, %s95
      %p99 = pneg %p93
      %p100 = scmp.eq.s32.totalorder %s16, 3
      %p101 = por %p99, %p100
      %p102 = scmp.ne.s32.totalorder %s94, %s97
      %p103 = scmp.eq.s32.totalorder %s16, 0
      %p104 = por %p102, %p103
      %p105 = scmp.ne.s32.totalorder %s94, %s97
      %p106 = scmp.eq.s32.totalorder %s21, 3
      %p107 = por %p105, %p106
      %p108 = scmp.ne.s32.totalorder %s97, %s98
      %p109 = scmp.eq.s32.totalorder %s21, 0
      %p110 = por %p108, %p109
      %p111 = scmp.ne.s32.totalorder %s97, %s98
      %p112 = scmp.eq.s32.totalorder %s22, 3
      %p113 = por %p111, %p112
      %p115 = scmp.ne.s32.totalorder %s98, %s114
      %p116 = scmp.eq.s32.totalorder %s22, 0
      %p117 = por %p115, %p116
      %p118 = scmp.le.s32.totalorder 1, %s16
      %p119 = scmp.lt.s32.totalorder %s16, 5
      %p120 = pnand %p118, %p119
      %p121 = pneg %p120
      // Predicated region
      $region9: #{tpu_custom_call.1} parent=5 // pred_check
        _
      $region10: #{tpu_custom_call.1} parent=5 // pred_check_branch
        %123 = sbr.rel (%p120) target = $region12
      $region11: #{tpu_custom_call.1} parent=5 // pred_region
        %s124 = ssub.s32 %s16, 1
        // Predicated region
        $region13: #{tpu_custom_call.1} parent=11 // pred_check
          %p125 = pneg %p63
        $region14: #{tpu_custom_call.1} parent=11 // pred_check_branch
          %127 = sbr.rel (%p125) target = $region16
        $region15: #{tpu_custom_call.1} parent=11 // pred_region
          %s129 = ssub.s32 8192, 8192
          %130 = vsyncadd [#allocation6], %s129
          %s131 = sshll.u32 [#allocation5], 4
          %s132 = int_to_ptr.vmem [resolvable:$true] %s131
          %137 = dma.hbm_to_vmem [thread:$0]  %s1, 8192, %s132, [#allocation6], 128, 128, 8
        $region16: #{tpu_custom_call.1} parent=11 // pred_fallthru
          _
        // Predicated region
        $region17: #{tpu_custom_call.1} parent=11 // pred_check
          %p138 = pneg %p84
        $region18: #{tpu_custom_call.1} parent=11 // pred_check_branch
          %140 = sbr.rel (%p138) target = $region20
        $region19: #{tpu_custom_call.1} parent=11 // pred_region
          %s142 = ssub.s32 128, 128
          %143 = vsyncadd [#allocation6], %s142
          %s145 = sshll.u32 [#allocation7], 4
          %s146 = int_to_ptr.vmem [resolvable:$true] %s145
          %148 = dma.hbm_to_vmem [thread:$0]  %s2, 128, %s146, [#allocation6]
        $region20: #{tpu_custom_call.1} parent=11 // pred_fallthru
          _
      $region12: #{tpu_custom_call.1} parent=5 // pred_fallthru
        _
      %p149 = scmp.lt.s32.totalorder %s16, 4
      // Predicated region
      $region21: #{tpu_custom_call.1} parent=5 // pred_check
        %p150 = pneg %p149
      $region22: #{tpu_custom_call.1} parent=5 // pred_check_branch
        %152 = sbr.rel (%p150) target = $region24
      $region23: #{tpu_custom_call.1} parent=5 // pred_region
        // Predicated region
        $region25: #{tpu_custom_call.1} parent=23 // pred_check
          %p153 = pneg %p36
        $region26: #{tpu_custom_call.1} parent=23 // pred_check_branch
          %155 = sbr.rel (%p153) target = $region28
        $region27: #{tpu_custom_call.1} parent=23 // pred_region
          %s156 = sand.u32 %s26, 1
          %s157 = scalar_lea.sflag [#allocation3], %s156
          %s158 = sand.u32 %s26, 1
          %s159 = smul.addr %s158, 8
          %s160 = scalar_lea.vmem [#allocation2], %s159
          %s162 = ssub.s32 128, 128
          %163 = vsyncadd %s157, %s162
          %s164 = smul.addr %s16, 128
          %s165 = scalar_lea.hbm %s0, %s164
          %s167 = sshll.u32 %s160, 4
          %s168 = int_to_ptr.vmem [resolvable:$true] %s167
          %170 = dma.hbm_to_vmem [thread:$0]  %s165, 128, %s168, %s157
        $region28: #{tpu_custom_call.1} parent=23 // pred_fallthru
          _
      $region24: #{tpu_custom_call.1} parent=5 // pred_fallthru
        _
      %p171 = scmp.le.s32.totalorder 1, %s16
      %p172 = scmp.lt.s32.totalorder %s16, 5
      %p173 = pnand %p171, %p172
      %p174 = pneg %p173
      // Predicated region
      $region29: #{tpu_custom_call.1} parent=5 // pred_check
        _
      $region30: #{tpu_custom_call.1} parent=5 // pred_check_branch
        %176 = sbr.rel (%p173) target = $region32
      $region31: #{tpu_custom_call.1} parent=5 // pred_region
        %s177 = ssub.s32 %s16, 1
        %s178 = sand.u32 %s29, 1
        %s179 = scalar_lea.sflag [#allocation3], %s178
        %s180 = sand.u32 %s29, 1
        %s181 = smul.addr %s180, 8
        %s182 = scalar_lea.vmem [#allocation2], %s181
        // Predicated region
        $region33: #{tpu_custom_call.1} parent=31 // pred_check
          %p183 = pneg %p42
        $region34: #{tpu_custom_call.1} parent=31 // pred_check_branch
          %185 = sbr.rel (%p183) target = $region36
        $region35: #{tpu_custom_call.1} parent=31 // pred_region
          %186 = dma.done %s179, 128
        $region36: #{tpu_custom_call.1} parent=31 // pred_fallthru
          _
        // Predicated region
        $region37: #{tpu_custom_call.1} parent=31 // pred_check
          %p187 = pneg %p63
        $region38: #{tpu_custom_call.1} parent=31 // pred_check_branch
          %189 = sbr.rel (%p187) target = $region40
        $region39: #{tpu_custom_call.1} parent=31 // pred_region
          %190 = dma.done [#allocation6], 8192
        $region40: #{tpu_custom_call.1} parent=31 // pred_fallthru
          _
        // Predicated region
        $region41: #{tpu_custom_call.1} parent=31 // pred_check
          %p191 = pneg %p84
        $region42: #{tpu_custom_call.1} parent=31 // pred_check_branch
          %193 = sbr.rel (%p191) target = $region44
        $region43: #{tpu_custom_call.1} parent=31 // pred_region
          %194 = dma.done [#allocation6], 128
        $region44: #{tpu_custom_call.1} parent=31 // pred_fallthru
          _
        %s195 = sand.u32 %s29, 1
        %s196 = scalar_lea.sflag [#allocation3], %s195
        %s197 = sand.u32 %s29, 1
        %s198 = smul.addr %s197, 8
        %s199 = scalar_lea.vmem [#allocation2], %s198
        %p200 = pneg %p42
        %p201 = pneg %p39
        %p202 = pneg %p63
        %p203 = pneg %p60
        %p204 = pneg %p84
        %p205 = pneg %p81
        %p206 = pneg %p110
        %p207 = pneg %p107
        %s208 = sand.u32 %s97, 1
        %s209 = scalar_lea.sflag [#allocation4], %s208
        %s210 = sand.u32 %s97, 1
        %s211 = smul.addr %s210, 8
        %s212 = scalar_lea.vmem [#allocation8], %s211
        %v213 = vld [vmem:[%s182] sm:$0xff]
        %v214 = vld [vmem:[#allocation5] sm:$0xff]
        %v215 = vld [vmem:[#allocation5 + $0x8] sm:$0xff]
        %v216 = vld [vmem:[#allocation5 + $0x10] sm:$0xff]
        %v217 = vld [vmem:[#allocation5 + $0x18] sm:$0xff]
        %v218 = vld [vmem:[#allocation5 + $0x20] sm:$0xff]
        %v219 = vld [vmem:[#allocation5 + $0x28] sm:$0xff]
        %v220 = vld [vmem:[#allocation5 + $0x30] sm:$0xff]
        %v221 = vld [vmem:[#allocation5 + $0x38] sm:$0xff]
        %v222 = vld [vmem:[#allocation5 + $0x40] sm:$0xff]
        %v223 = vld [vmem:[#allocation5 + $0x48] sm:$0xff]
        %v224 = vld [vmem:[#allocation5 + $0x50] sm:$0xff]
        %v225 = vld [vmem:[#allocation5 + $0x58] sm:$0xff]
        %v226 = vld [vmem:[#allocation5 + $0x60] sm:$0xff]
        %v227 = vld [vmem:[#allocation5 + $0x68] sm:$0xff]
        %v228 = vld [vmem:[#allocation5 + $0x70] sm:$0xff]
        %v229 = vld [vmem:[#allocation5 + $0x78] sm:$0xff]
        %v230 = vld [vmem:[#allocation7] sm:$0x1]
        %v231 = vld [vmem:[#allocation7 + $0x1] sm:$0x1]
        %232 = vmatprep.subr.mxu0 0.0
        %233 = vmatpush1.msra.mxu0 %v214
        %234 = vmatprep.subr.mxu0 0.0
        %235 = vmatpush1.msra.mxu0 %v215
        %236 = vmatprep.subr.mxu0 0.0
        %237 = vmatpush1.msra.mxu0 %v216
        %238 = vmatprep.subr.mxu0 0.0
        %239 = vmatpush1.msra.mxu0 %v217
        %240 = vmatprep.subr.mxu0 0.0
        %241 = vmatpush1.msra.mxu0 %v218
        %242 = vmatprep.subr.mxu0 0.0
        %243 = vmatpush1.msra.mxu0 %v219
        %244 = vmatprep.subr.mxu0 0.0
        %245 = vmatpush1.msra.mxu0 %v220
        %246 = vmatprep.subr.mxu0 0.0
        %247 = vmatpush1.msra.mxu0 %v221
        %248 = vmatprep.subr.mxu0 0.0
        %249 = vmatpush1.msra.mxu0 %v222
        %250 = vmatprep.subr.mxu0 0.0
        %251 = vmatpush1.msra.mxu0 %v223
        %252 = vmatprep.subr.mxu0 0.0
        %253 = vmatpush1.msra.mxu0 %v224
        %254 = vmatprep.subr.mxu0 0.0
        %255 = vmatpush1.msra.mxu0 %v225
        %256 = vmatprep.subr.mxu0 0.0
        %257 = vmatpush1.msra.mxu0 %v226
        %258 = vmatprep.subr.mxu0 0.0
        %259 = vmatpush1.msra.mxu0 %v227
        %260 = vmatprep.subr.mxu0 0.0
        %261 = vmatpush1.msra.mxu0 %v228
        %262 = vmatprep.subr.mxu0 0.0
        %263 = vmatpush1.msra.mxu0 %v229
        %264 = vmatprep.subr.mxu0 0.0
        %265 = vmatpush1.msra.mxu0 0.0
        %266 = vmatprep.subr.mxu0 0.0
        %267 = vmatpush1.msra.mxu0 0.0
        %268 = vmatprep.subr.mxu0 0.0
        %269 = vmatpush1.msra.mxu0 0.0
        %270 = vmatprep.subr.mxu0 0.0
        %271 = vmatpush1.msra.mxu0 0.0
        %272 = vmatprep.subr.mxu0 0.0
        %273 = vmatpush1.msra.mxu0 0.0
        %274 = vmatprep.subr.mxu0 0.0
        %275 = vmatpush1.msra.mxu0 0.0
        %276 = vmatprep.subr.mxu0 0.0
        %277 = vmatpush1.msra.mxu0 0.0
        %278 = vmatprep.subr.mxu0 0.0
        %279 = vmatpush1.msra.mxu0 0.0
        %280 = vmatprep.subr.mxu0 0.0
        %281 = vmatpush1.msra.mxu0 0.0
        %282 = vmatprep.subr.mxu0 0.0
        %283 = vmatpush1.msra.mxu0 0.0
        %284 = vmatprep.subr.mxu0 0.0
        %285 = vmatpush1.msra.mxu0 0.0
        %286 = vmatprep.subr.mxu0 0.0
        %287 = vmatpush1.msra.mxu0 0.0
        %288 = vmatprep.subr.mxu0 0.0
        %289 = vmatpush1.msra.mxu0 0.0
        %290 = vmatprep.subr.mxu0 0.0
        %291 = vmatpush1.msra.mxu0 0.0
        %292 = vmatprep.subr.mxu0 0.0
        %293 = vmatpush1.msra.mxu0 0.0
        %294 = vmatprep.subr.mxu0 0.0
        %295 = vmatpush1.msra.mxu0 0.0
        %296 = vmatprep.mubr.f32.mxu0 0.0
        %297 = vmatmul.mubr.f32.gmra.mrb[0].mxu0 %v213
        %v298 = vpop.f32.mrb[0].mxu0
        %v299 = vadd.f32 0.0, %v298
        %v300 = vpop.f32.mrb[0].mxu0
        %301 = vdwg.mxu0
        %v302 = vrot.slane %v299, 4
        %v303 = vadd.f32 %v299, %v302
        %v304 = vrot.slane %v303, 2
        %v305 = vadd.f32 %v303, %v304
        %v306 = vrot.slane %v305, 1
        %v307 = vadd.f32 %v305, %v306
        %v308 = vmul.f32 %v307, 0.125
        %v309 = vmul.f32 %v299, %v299
        %v310 = vrot.slane %v309, 4
        %v311 = vadd.f32 %v309, %v310
        %v312 = vrot.slane %v311, 2
        %v313 = vadd.f32 %v311, %v312
        %v314 = vrot.slane %v313, 1
        %v315 = vadd.f32 %v313, %v314
        %v316 = vmul.f32 %v315, 0.125
        %v317 = vmul.f32 %v308, %v308
        %v318 = vsub.f32 %v316, %v317
        %v319 = vmax.f32 %v318, 0.0
        %v320 = vadd.f32 %v319, 1e-05
        %v321 = vrsqrt.pop %v320
        %v322 = vmul.f32 %v230, %v321
        %v323 = vmul.f32 %v308, %v322
        %v324 = vsub.f32 %v231, %v323
        %v325 = vlaneseq
        %v326 = vshrl.u32 %v325, 7
        %v327 = vsub.s32 0, %v326
        %v328 = vrot.slane %v322, %v327
        %v329 = vmul.f32 %v299, %v328
        %v330 = vlaneseq
        %v331 = vshrl.u32 %v330, 7
        %v332 = vsub.s32 0, %v331
        %v333 = vrot.slane %v324, %v332
        %v334 = vadd.f32 %v329, %v333
        %v335 = vmax.f32 %v334, 0.0
        %s336 = scalar_lea.vmem [#allocation5], 128
        %v337 = vld [vmem:[%s336] sm:$0xff]
        %v338 = vld [vmem:[%s336 + $0x8] sm:$0xff]
        %v339 = vld [vmem:[%s336 + $0x10] sm:$0xff]
        %v340 = vld [vmem:[%s336 + $0x18] sm:$0xff]
        %v341 = vld [vmem:[%s336 + $0x20] sm:$0xff]
        %v342 = vld [vmem:[%s336 + $0x28] sm:$0xff]
        %v343 = vld [vmem:[%s336 + $0x30] sm:$0xff]
        %v344 = vld [vmem:[%s336 + $0x38] sm:$0xff]
        %v345 = vld [vmem:[%s336 + $0x40] sm:$0xff]
        %v346 = vld [vmem:[%s336 + $0x48] sm:$0xff]
        %v347 = vld [vmem:[%s336 + $0x50] sm:$0xff]
        %v348 = vld [vmem:[%s336 + $0x58] sm:$0xff]
        %v349 = vld [vmem:[%s336 + $0x60] sm:$0xff]
        %v350 = vld [vmem:[%s336 + $0x68] sm:$0xff]
        %v351 = vld [vmem:[%s336 + $0x70] sm:$0xff]
        %v352 = vld [vmem:[%s336 + $0x78] sm:$0xff]
        %v353 = vld [vmem:[#allocation7 + $0x2] sm:$0x1]
        %v354 = vld [vmem:[#allocation7 + $0x3] sm:$0x1]
        %355 = vmatprep.subr.mxu0 0.0
        %356 = vmatpush1.msra.mxu0 %v337
        %357 = vmatprep.subr.mxu0 0.0
        %358 = vmatpush1.msra.mxu0 %v338
        %359 = vmatprep.subr.mxu0 0.0
        %360 = vmatpush1.msra.mxu0 %v339
        %361 = vmatprep.subr.mxu0 0.0
        %362 = vmatpush1.msra.mxu0 %v340
        %363 = vmatprep.subr.mxu0 0.0
        %364 = vmatpush1.msra.mxu0 %v341
        %365 = vmatprep.subr.mxu0 0.0
        %366 = vmatpush1.msra.mxu0 %v342
        %367 = vmatprep.subr.mxu0 0.0
        %368 = vmatpush1.msra.mxu0 %v343
        %369 = vmatprep.subr.mxu0 0.0
        %370 = vmatpush1.msra.mxu0 %v344
        %371 = vmatprep.subr.mxu0 0.0
        %372 = vmatpush1.msra.mxu0 %v345
        %373 = vmatprep.subr.mxu0 0.0
        %374 = vmatpush1.msra.mxu0 %v346
        %375 = vmatprep.subr.mxu0 0.0
        %376 = vmatpush1.msra.mxu0 %v347
        %377 = vmatprep.subr.mxu0 0.0
        %378 = vmatpush1.msra.mxu0 %v348
        %379 = vmatprep.subr.mxu0 0.0
        %380 = vmatpush1.msra.mxu0 %v349
        %381 = vmatprep.subr.mxu0 0.0
        %382 = vmatpush1.msra.mxu0 %v350
        %383 = vmatprep.subr.mxu0 0.0
        %384 = vmatpush1.msra.mxu0 %v351
        %385 = vmatprep.subr.mxu0 0.0
        %386 = vmatpush1.msra.mxu0 %v352
        %387 = vmatprep.subr.mxu0 0.0
        %388 = vmatpush1.msra.mxu0 0.0
        %389 = vmatprep.subr.mxu0 0.0
        %390 = vmatpush1.msra.mxu0 0.0
        %391 = vmatprep.subr.mxu0 0.0
        %392 = vmatpush1.msra.mxu0 0.0
        %393 = vmatprep.subr.mxu0 0.0
        %394 = vmatpush1.msra.mxu0 0.0
        %395 = vmatprep.subr.mxu0 0.0
        %396 = vmatpush1.msra.mxu0 0.0
        %397 = vmatprep.subr.mxu0 0.0
        %398 = vmatpush1.msra.mxu0 0.0
        %399 = vmatprep.subr.mxu0 0.0
        %400 = vmatpush1.msra.mxu0 0.0
        %401 = vmatprep.subr.mxu0 0.0
        %402 = vmatpush1.msra.mxu0 0.0
        %403 = vmatprep.subr.mxu0 0.0
        %404 = vmatpush1.msra.mxu0 0.0
        %405 = vmatprep.subr.mxu0 0.0
        %406 = vmatpush1.msra.mxu0 0.0
        %407 = vmatprep.subr.mxu0 0.0
        %408 = vmatpush1.msra.mxu0 0.0
        %409 = vmatprep.subr.mxu0 0.0
        %410 = vmatpush1.msra.mxu0 0.0
        %411 = vmatprep.subr.mxu0 0.0
        %412 = vmatpush1.msra.mxu0 0.0
        %413 = vmatprep.subr.mxu0 0.0
        %414 = vmatpush1.msra.mxu0 0.0
        %415 = vmatprep.subr.mxu0 0.0
        %416 = vmatpush1.msra.mxu0 0.0
        %417 = vmatprep.subr.mxu0 0.0
        %418 = vmatpush1.msra.mxu0 0.0
        %419 = vmatprep.mubr.f32.mxu0 0.0
        %420 = vmatmul.mubr.f32.gmra.mrb[0].mxu0 %v335
        %v421 = vpop.f32.mrb[0].mxu0
        %v422 = vadd.f32 0.0, %v421
        %v423 = vpop.f32.mrb[0].mxu0
        %424 = vdwg.mxu0
        %v425 = vrot.slane %v422, 4
        %v426 = vadd.f32 %v422, %v425
        %v427 = vrot.slane %v426, 2
        %v428 = vadd.f32 %v426, %v427
        %v429 = vrot.slane %v428, 1
        %v430 = vadd.f32 %v428, %v429
        %v431 = vmul.f32 %v430, 0.125
        %v432 = vmul.f32 %v422, %v422
        %v433 = vrot.slane %v432, 4
        %v434 = vadd.f32 %v432, %v433
        %v435 = vrot.slane %v434, 2
        %v436 = vadd.f32 %v434, %v435
        %v437 = vrot.slane %v436, 1
        %v438 = vadd.f32 %v436, %v437
        %v439 = vmul.f32 %v438, 0.125
        %v440 = vmul.f32 %v431, %v431
        %v441 = vsub.f32 %v439, %v440
        %v442 = vmax.f32 %v441, 0.0
        %v443 = vadd.f32 %v442, 1e-05
        %v444 = vrsqrt.pop %v443
        %v445 = vmul.f32 %v353, %v444
        %v446 = vmul.f32 %v431, %v445
        %v447 = vsub.f32 %v354, %v446
        %v448 = vlaneseq
        %v449 = vshrl.u32 %v448, 7
        %v450 = vsub.s32 0, %v449
        %v451 = vrot.slane %v445, %v450
        %v452 = vmul.f32 %v422, %v451
        %v453 = vlaneseq
        %v454 = vshrl.u32 %v453, 7
        %v455 = vsub.s32 0, %v454
        %v456 = vrot.slane %v447, %v455
        %v457 = vadd.f32 %v452, %v456
        %v458 = vmax.f32 %v457, 0.0
        %s459 = scalar_lea.vmem [#allocation5], 256
        %v460 = vld [vmem:[%s459] sm:$0xff]
        %v461 = vld [vmem:[%s459 + $0x8] sm:$0xff]
        %v462 = vld [vmem:[%s459 + $0x10] sm:$0xff]
        %v463 = vld [vmem:[%s459 + $0x18] sm:$0xff]
        %v464 = vld [vmem:[%s459 + $0x20] sm:$0xff]
        %v465 = vld [vmem:[%s459 + $0x28] sm:$0xff]
        %v466 = vld [vmem:[%s459 + $0x30] sm:$0xff]
        %v467 = vld [vmem:[%s459 + $0x38] sm:$0xff]
        %v468 = vld [vmem:[%s459 + $0x40] sm:$0xff]
        %v469 = vld [vmem:[%s459 + $0x48] sm:$0xff]
        %v470 = vld [vmem:[%s459 + $0x50] sm:$0xff]
        %v471 = vld [vmem:[%s459 + $0x58] sm:$0xff]
        %v472 = vld [vmem:[%s459 + $0x60] sm:$0xff]
        %v473 = vld [vmem:[%s459 + $0x68] sm:$0xff]
        %v474 = vld [vmem:[%s459 + $0x70] sm:$0xff]
        %v475 = vld [vmem:[%s459 + $0x78] sm:$0xff]
        %v476 = vld [vmem:[#allocation7 + $0x4] sm:$0x1]
        %v477 = vld [vmem:[#allocation7 + $0x5] sm:$0x1]
        %478 = vmatprep.subr.mxu0 0.0
        %479 = vmatpush1.msra.mxu0 %v460
        %480 = vmatprep.subr.mxu0 0.0
        %481 = vmatpush1.msra.mxu0 %v461
        %482 = vmatprep.subr.mxu0 0.0
        %483 = vmatpush1.msra.mxu0 %v462
        %484 = vmatprep.subr.mxu0 0.0
        %485 = vmatpush1.msra.mxu0 %v463
        %486 = vmatprep.subr.mxu0 0.0
        %487 = vmatpush1.msra.mxu0 %v464
        %488 = vmatprep.subr.mxu0 0.0
        %489 = vmatpush1.msra.mxu0 %v465
        %490 = vmatprep.subr.mxu0 0.0
        %491 = vmatpush1.msra.mxu0 %v466
        %492 = vmatprep.subr.mxu0 0.0
        %493 = vmatpush1.msra.mxu0 %v467
        %494 = vmatprep.subr.mxu0 0.0
        %495 = vmatpush1.msra.mxu0 %v468
        %496 = vmatprep.subr.mxu0 0.0
        %497 = vmatpush1.msra.mxu0 %v469
        %498 = vmatprep.subr.mxu0 0.0
        %499 = vmatpush1.msra.mxu0 %v470
        %500 = vmatprep.subr.mxu0 0.0
        %501 = vmatpush1.msra.mxu0 %v471
        %502 = vmatprep.subr.mxu0 0.0
        %503 = vmatpush1.msra.mxu0 %v472
        %504 = vmatprep.subr.mxu0 0.0
        %505 = vmatpush1.msra.mxu0 %v473
        %506 = vmatprep.subr.mxu0 0.0
        %507 = vmatpush1.msra.mxu0 %v474
        %508 = vmatprep.subr.mxu0 0.0
        %509 = vmatpush1.msra.mxu0 %v475
        %510 = vmatprep.subr.mxu0 0.0
        %511 = vmatpush1.msra.mxu0 0.0
        %512 = vmatprep.subr.mxu0 0.0
        %513 = vmatpush1.msra.mxu0 0.0
        %514 = vmatprep.subr.mxu0 0.0
        %515 = vmatpush1.msra.mxu0 0.0
        %516 = vmatprep.subr.mxu0 0.0
        %517 = vmatpush1.msra.mxu0 0.0
        %518 = vmatprep.subr.mxu0 0.0
        %519 = vmatpush1.msra.mxu0 0.0
        %520 = vmatprep.subr.mxu0 0.0
        %521 = vmatpush1.msra.mxu0 0.0
        %522 = vmatprep.subr.mxu0 0.0
        %523 = vmatpush1.msra.mxu0 0.0
        %524 = vmatprep.subr.mxu0 0.0
        %525 = vmatpush1.msra.mxu0 0.0
        %526 = vmatprep.subr.mxu0 0.0
        %527 = vmatpush1.msra.mxu0 0.0
        %528 = vmatprep.subr.mxu0 0.0
        %529 = vmatpush1.msra.mxu0 0.0
        %530 = vmatprep.subr.mxu0 0.0
        %531 = vmatpush1.msra.mxu0 0.0
        %532 = vmatprep.subr.mxu0 0.0
        %533 = vmatpush1.msra.mxu0 0.0
        %534 = vmatprep.subr.mxu0 0.0
        %535 = vmatpush1.msra.mxu0 0.0
        %536 = vmatprep.subr.mxu0 0.0
        %537 = vmatpush1.msra.mxu0 0.0
        %538 = vmatprep.subr.mxu0 0.0
        %539 = vmatpush1.msra.mxu0 0.0
        %540 = vmatprep.subr.mxu0 0.0
        %541 = vmatpush1.msra.mxu0 0.0
        %542 = vmatprep.mubr.f32.mxu0 0.0
        %543 = vmatmul.mubr.f32.gmra.mrb[0].mxu0 %v458
        %v544 = vpop.f32.mrb[0].mxu0
        %v545 = vadd.f32 0.0, %v544
        %v546 = vpop.f32.mrb[0].mxu0
        %547 = vdwg.mxu0
        %v548 = vrot.slane %v545, 4
        %v549 = vadd.f32 %v545, %v548
        %v550 = vrot.slane %v549, 2
        %v551 = vadd.f32 %v549, %v550
        %v552 = vrot.slane %v551, 1
        %v553 = vadd.f32 %v551, %v552
        %v554 = vmul.f32 %v553, 0.125
        %v555 = vmul.f32 %v545, %v545
        %v556 = vrot.slane %v555, 4
        %v557 = vadd.f32 %v555, %v556
        %v558 = vrot.slane %v557, 2
        %v559 = vadd.f32 %v557, %v558
        %v560 = vrot.slane %v559, 1
        %v561 = vadd.f32 %v559, %v560
        %v562 = vmul.f32 %v561, 0.125
        %v563 = vmul.f32 %v554, %v554
        %v564 = vsub.f32 %v562, %v563
        %v565 = vmax.f32 %v564, 0.0
        %v566 = vadd.f32 %v565, 1e-05
        %v567 = vrsqrt.pop %v566
        %v568 = vmul.f32 %v476, %v567
        %v569 = vmul.f32 %v554, %v568
        %v570 = vsub.f32 %v477, %v569
        %v571 = vlaneseq
        %v572 = vshrl.u32 %v571, 7
        %v573 = vsub.s32 0, %v572
        %v574 = vrot.slane %v568, %v573
        %v575 = vmul.f32 %v545, %v574
        %v576 = vlaneseq
        %v577 = vshrl.u32 %v576, 7
        %v578 = vsub.s32 0, %v577
        %v579 = vrot.slane %v570, %v578
        %v580 = vadd.f32 %v575, %v579
        %v581 = vmax.f32 %v580, 0.0
        %s582 = scalar_lea.vmem [#allocation5], 384
        %v583 = vld [vmem:[%s582] sm:$0xff]
        %v584 = vld [vmem:[%s582 + $0x8] sm:$0xff]
        %v585 = vld [vmem:[%s582 + $0x10] sm:$0xff]
        %v586 = vld [vmem:[%s582 + $0x18] sm:$0xff]
        %v587 = vld [vmem:[%s582 + $0x20] sm:$0xff]
        %v588 = vld [vmem:[%s582 + $0x28] sm:$0xff]
        %v589 = vld [vmem:[%s582 + $0x30] sm:$0xff]
        %v590 = vld [vmem:[%s582 + $0x38] sm:$0xff]
        %v591 = vld [vmem:[%s582 + $0x40] sm:$0xff]
        %v592 = vld [vmem:[%s582 + $0x48] sm:$0xff]
        %v593 = vld [vmem:[%s582 + $0x50] sm:$0xff]
        %v594 = vld [vmem:[%s582 + $0x58] sm:$0xff]
        %v595 = vld [vmem:[%s582 + $0x60] sm:$0xff]
        %v596 = vld [vmem:[%s582 + $0x68] sm:$0xff]
        %v597 = vld [vmem:[%s582 + $0x70] sm:$0xff]
        %v598 = vld [vmem:[%s582 + $0x78] sm:$0xff]
        %v599 = vld [vmem:[#allocation7 + $0x6] sm:$0x1]
        %v600 = vlaneseq
        %v601 = vshrl.u32 %v600, 7
        %v602 = vsub.s32 0, %v601
        %v603 = vrot.slane %v599, %v602
        %604 = vmatprep.subr.mxu0 0.0
        %605 = vmatpush1.msra.mxu0 %v583
        %606 = vmatprep.subr.mxu0 0.0
        %607 = vmatpush1.msra.mxu0 %v584
        %608 = vmatprep.subr.mxu0 0.0
        %609 = vmatpush1.msra.mxu0 %v585
        %610 = vmatprep.subr.mxu0 0.0
        %611 = vmatpush1.msra.mxu0 %v586
        %612 = vmatprep.subr.mxu0 0.0
        %613 = vmatpush1.msra.mxu0 %v587
        %614 = vmatprep.subr.mxu0 0.0
        %615 = vmatpush1.msra.mxu0 %v588
        %616 = vmatprep.subr.mxu0 0.0
        %617 = vmatpush1.msra.mxu0 %v589
        %618 = vmatprep.subr.mxu0 0.0
        %619 = vmatpush1.msra.mxu0 %v590
        %620 = vmatprep.subr.mxu0 0.0
        %621 = vmatpush1.msra.mxu0 %v591
        %622 = vmatprep.subr.mxu0 0.0
        %623 = vmatpush1.msra.mxu0 %v592
        %624 = vmatprep.subr.mxu0 0.0
        %625 = vmatpush1.msra.mxu0 %v593
        %626 = vmatprep.subr.mxu0 0.0
        %627 = vmatpush1.msra.mxu0 %v594
        %628 = vmatprep.subr.mxu0 0.0
        %629 = vmatpush1.msra.mxu0 %v595
        %630 = vmatprep.subr.mxu0 0.0
        %631 = vmatpush1.msra.mxu0 %v596
        %632 = vmatprep.subr.mxu0 0.0
        %633 = vmatpush1.msra.mxu0 %v597
        %634 = vmatprep.subr.mxu0 0.0
        %635 = vmatpush1.msra.mxu0 %v598
        %636 = vmatprep.subr.mxu0 0.0
        %637 = vmatpush1.msra.mxu0 0.0
        %638 = vmatprep.subr.mxu0 0.0
        %639 = vmatpush1.msra.mxu0 0.0
        %640 = vmatprep.subr.mxu0 0.0
        %641 = vmatpush1.msra.mxu0 0.0
        %642 = vmatprep.subr.mxu0 0.0
        %643 = vmatpush1.msra.mxu0 0.0
        %644 = vmatprep.subr.mxu0 0.0
        %645 = vmatpush1.msra.mxu0 0.0
        %646 = vmatprep.subr.mxu0 0.0
        %647 = vmatpush1.msra.mxu0 0.0
        %648 = vmatprep.subr.mxu0 0.0
        %649 = vmatpush1.msra.mxu0 0.0
        %650 = vmatprep.subr.mxu0 0.0
        %651 = vmatpush1.msra.mxu0 0.0
        %652 = vmatprep.subr.mxu0 0.0
        %653 = vmatpush1.msra.mxu0 0.0
        %654 = vmatprep.subr.mxu0 0.0
        %655 = vmatpush1.msra.mxu0 0.0
        %656 = vmatprep.subr.mxu0 0.0
        %657 = vmatpush1.msra.mxu0 0.0
        %658 = vmatprep.subr.mxu0 0.0
        %659 = vmatpush1.msra.mxu0 0.0
        %660 = vmatprep.subr.mxu0 0.0
        %661 = vmatpush1.msra.mxu0 0.0
        %662 = vmatprep.subr.mxu0 0.0
        %663 = vmatpush1.msra.mxu0 0.0
        %664 = vmatprep.subr.mxu0 0.0
        %665 = vmatpush1.msra.mxu0 0.0
        %666 = vmatprep.subr.mxu0 0.0
        %667 = vmatpush1.msra.mxu0 0.0
        %668 = vmatprep.mubr.f32.mxu0 0.0
        %669 = vmatmul.mubr.f32.gmra.mrb[0].mxu0 %v581
        %v670 = vpop.f32.mrb[0].mxu0
        %v671 = vadd.f32 %v603, %v670
        %v672 = vpop.f32.mrb[0].mxu0
        %673 = vdwg.mxu0
        %674 = vst [vmem:[%s212] sm:$0xff] %v671
        %s675 = sand.u32 %s97, 1
        %s676 = scalar_lea.sflag [#allocation4], %s675
        %s677 = sand.u32 %s97, 1
        %s678 = smul.addr %s677, 8
        %s679 = scalar_lea.vmem [#allocation8], %s678
        // Predicated region
        $region45: #{tpu_custom_call.1} parent=31 // pred_check
          %p680 = pneg %p107
        $region46: #{tpu_custom_call.1} parent=31 // pred_check_branch
          %682 = sbr.rel (%p680) target = $region48
        $region47: #{tpu_custom_call.1} parent=31 // pred_region
          %s684 = ssub.s32 128, 128
          %685 = vsyncadd %s676, %s684
          %s686 = smul.addr %s21, 128
          %s687 = scalar_lea.hbm %s3, %s686
          %s689 = sshll.u32 %s679, 4
          %s690 = int_to_ptr.vmem [resolvable:$true] %s689
          %692 = dma.vmem_to_hbm [thread:$0]  %s690, 128, %s687, %s676
        $region48: #{tpu_custom_call.1} parent=31 // pred_fallthru
          _
      $region32: #{tpu_custom_call.1} parent=5 // pred_fallthru
        _
      %p693 = scmp.le.s32.totalorder 2, %s16
      // Predicated region
      $region49: #{tpu_custom_call.1} parent=5 // pred_check
        %p694 = pneg %p693
      $region50: #{tpu_custom_call.1} parent=5 // pred_check_branch
        %696 = sbr.rel (%p694) target = $region52
      $region51: #{tpu_custom_call.1} parent=5 // pred_region
        %s697 = ssub.s32 %s16, 2
        // Predicated region
        $region53: #{tpu_custom_call.1} parent=51 // pred_check
          %p698 = pneg %p113
        $region54: #{tpu_custom_call.1} parent=51 // pred_check_branch
          %700 = sbr.rel (%p698) target = $region56
        $region55: #{tpu_custom_call.1} parent=51 // pred_region
          %s701 = sand.u32 %s98, 1
          %s702 = scalar_lea.sflag [#allocation4], %s701
          %s703 = sand.u32 %s98, 1
          %s704 = smul.addr %s703, 8
          %s705 = scalar_lea.vmem [#allocation8], %s704
          %706 = dma.done %s702, 128
        $region56: #{tpu_custom_call.1} parent=51 // pred_fallthru
          _
      $region52: #{tpu_custom_call.1} parent=5 // pred_fallthru
        _
    $region6: #{tpu_custom_call.1} parent=1 // loop_footer
      %s20 = sadd.s32 1, %s16
    $region7: #{tpu_custom_call.1} parent=1 // loop_footer_branch
      %15 = sbr.rel target = $region3
    $region8: #{tpu_custom_call.1} parent=1 // loop_exit
      _
    %707 = vsyncpa [#allocation3], 1
    %s708 = scalar_lea.sflag [#allocation3], 1
    %709 = vsyncpa %s708, 1
    %710 = vsyncpa [#allocation6], 1
    %711 = vsyncpa [#allocation4], 1
    %s712 = scalar_lea.sflag [#allocation4], 1
    %713 = vsyncpa %s712, 1

</llo_original>
